<compile_context>
chip_gen: v6e
topology: v6e:2x2x1
jax: 0.10.0
libtpu: 0.0.40
codegen_flags: <defaults>
</compile_context>

<pallas_src>
import math

import jax
import jax.numpy as jnp
from jax.experimental import pallas as pl
from jax.experimental.pallas import tpu as pltpu


def _round_up(n, m):
    return (n + m - 1) // m * m


def _mlp_kernel(x_ref, w1_ref, b1_ref, w2_ref, b2_ref, w3_ref, b3_ref, o_ref):
    # x_ref:  (input_dim, TB) bf16   (batch on lanes)
    # w1_ref: (128, input_dim) bf16, b1_ref: (128, 1) f32
    # w2_ref: (64, 128) bf16,        b2_ref: (64, 1) f32
    # w3_ref: (64, 1) f32,           b3_ref: (1, 1) f32
    # o_ref:  (1, TB) f32            (lane-dense output)

    # fc1 + ReLU: (128, in) @ (in, TB) -> (128, TB), bf16 MXU, f32 accumulate
    h1 = jnp.dot(w1_ref[...], x_ref[...], preferred_element_type=jnp.float32)
    h1 = jnp.maximum(h1 + b1_ref[...], 0.0)

    # fc2 + ReLU: (64, 128) @ (128, TB) -> (64, TB)
    h2 = jnp.dot(w2_ref[...], h1.astype(jnp.bfloat16),
                 preferred_element_type=jnp.float32)
    h2 = jnp.maximum(h2 + b2_ref[...], 0.0)

    # fc3 (out_features=1): VPU multiply + sublane reduction, not an MXU matmul
    logits = jnp.sum(h2 * w3_ref[...], axis=0, keepdims=True) + b3_ref[...]

    # Sigmoid via EUP exp + approximate reciprocal
    o_ref[...] = pl.reciprocal(1.0 + jnp.exp(-logits), approx=True)


def loan_risk_forward(x, params, *, tb=None):
    """x: (B, input_dim) float32. params: PyTorch-layout weights/biases (f32)."""
    B, input_dim = x.shape

    # Batch tile: multiple of 128 (lane-dense), large for big batches to
    # amortize the ~0.35 us/step grid overhead, but never larger than needed.
    if tb is None:
        tb = min(1024, _round_up(max(B, 1), 128))
    b_pad = _round_up(B, tb)
    num_tiles = pl.cdiv(b_pad, tb)

    # Layout plumbing (outside the kernel): present x feature-major in bf16,
    # padded on the batch (lane) axis. Padding rows are sliced off below.
    x_t = jnp.transpose(x).astype(jnp.bfloat16)
    if b_pad != B:
        x_t = jnp.pad(x_t, ((0, 0), (0, b_pad - B)))

    # Weights stay in PyTorch (out_features, in_features) layout.
    w1 = params["w1"].astype(jnp.bfloat16)                     # (128, input_dim)
    b1 = params["b1"].reshape(128, 1).astype(jnp.float32)
    w2 = params["w2"].astype(jnp.bfloat16)                     # (64, 128)
    b2 = params["b2"].reshape(64, 1).astype(jnp.float32)
    w3 = params["w3"].reshape(64, 1).astype(jnp.float32)       # (1, 64) -> (64, 1)
    b3 = params["b3"].reshape(1, 1).astype(jnp.float32)

    out = pl.pallas_call(
        _mlp_kernel,
        out_shape=jax.ShapeDtypeStruct((1, b_pad), jnp.float32),
        grid=(num_tiles,),
        in_specs=[
            pl.BlockSpec((input_dim, tb), lambda i: (0, i)),   # x tile (pipelined)
            pl.BlockSpec((128, input_dim), lambda i: (0, 0)),  # weights: resident
            pl.BlockSpec((128, 1), lambda i: (0, 0)),
            pl.BlockSpec((64, 128), lambda i: (0, 0)),
            pl.BlockSpec((64, 1), lambda i: (0, 0)),
            pl.BlockSpec((64, 1), lambda i: (0, 0)),
            pl.BlockSpec((1, 1), lambda i: (0, 0)),
        ],
        out_specs=pl.BlockSpec((1, tb), lambda i: (0, i)),     # lane-dense output
        compiler_params=pltpu.CompilerParams(
            dimension_semantics=("parallel",),                 # 2 TCs on v7x
        ),
    )(x_t, w1, b1, w2, b2, w3, b3)

    return out[0, :B].reshape(B, 1)


def init_params(input_dim, key):
    """Deterministic init mimicking nn.Linear's U(-1/sqrt(fan_in), 1/sqrt(fan_in)).

    Weights are kept in PyTorch (out_features, in_features) layout; the kernel
    consumes them directly (feature-major activations => no transposition).
    """
    dims = [(input_dim, 128), (128, 64), (64, 1)]
    params = {}
    keys = jax.random.split(key, 2 * len(dims))
    for i, (fan_in, fan_out) in enumerate(dims):
        bound = 1.0 / math.sqrt(fan_in)
        params[f"w{i + 1}"] = jax.random.uniform(
            keys[2 * i], (fan_out, fan_in), jnp.float32, -bound, bound)
        params[f"b{i + 1}"] = jax.random.uniform(
            keys[2 * i + 1], (fan_out,), jnp.float32, -bound, bound)
    return params


def _reference_forward(x, params):
    """Pure-f32 JAX reference matching the PyTorch module exactly."""
    h = jnp.maximum(x @ params["w1"].T + params["b1"], 0.0)
    h = jnp.maximum(h @ params["w2"].T + params["b2"], 0.0)
    return jax.nn.sigmoid(h @ params["w3"].T + params["b3"])


if __name__ == "__main__":
    INPUT_DIM = 32
    BATCH = 8   # NOTE: for v5e, batch many requests per call; B=8 is pure launch overhead.

    key = jax.random.PRNGKey(0)
    k_params, k_x = jax.random.split(key)
    params = init_params(INPUT_DIM, k_params)
    x = jax.random.normal(k_x, (BATCH, INPUT_DIM), jnp.float32)

    out = loan_risk_forward(x, params)
    out = jax.block_until_ready(out)

    ref = _reference_forward(x, params)
    assert out.shape == (BATCH, 1)
    # bf16 MXU inputs (f32 accumulation) + approx reciprocal => looser tolerance
    # than the pure-f32 reference.
    assert jnp.allclose(out, ref, atol=2e-2, rtol=2e-2), (
        f"max abs err {jnp.max(jnp.abs(out - ref))}")

    print("KERNEL_OK")
</pallas_src>

<mosaic_0001>
module attributes {stable_mosaic.version = 11 : i64} {
  func.func @_mlp_kernel(%arg0: i32, %arg1: memref<32x128xbf16, #tpu.memory_space<vmem>>, %arg2: memref<128x32xbf16, #tpu.memory_space<vmem>>, %arg3: memref<128x1xf32, #tpu.memory_space<vmem>>, %arg4: memref<64x128xbf16, #tpu.memory_space<vmem>>, %arg5: memref<64x1xf32, #tpu.memory_space<vmem>>, %arg6: memref<64x1xf32, #tpu.memory_space<vmem>>, %arg7: memref<1x1xf32, #tpu.memory_space<vmem>>, %arg8: memref<1x128xf32, #tpu.memory_space<vmem>>) attributes {dimension_semantics = [#tpu.dimension_semantics<parallel>], iteration_bounds = array<i64: 1>, scalar_prefetch = 0 : i64, scratch_operands = 0 : i64, tpu.core_type = #tpu.core_type<tc>, window_params = [{transform_indices = @transform_0, window_bounds = array<i64: 32, 128>}, {pipeline_mode = #tpu.pipeline_mode<synchronous>, transform_indices = @transform_1, window_bounds = array<i64: 128, 32>}, {pipeline_mode = #tpu.pipeline_mode<synchronous>, transform_indices = @transform_2, window_bounds = array<i64: 128, 1>}, {pipeline_mode = #tpu.pipeline_mode<synchronous>, transform_indices = @transform_3, window_bounds = array<i64: 64, 128>}, {pipeline_mode = #tpu.pipeline_mode<synchronous>, transform_indices = @transform_4, window_bounds = array<i64: 64, 1>}, {pipeline_mode = #tpu.pipeline_mode<synchronous>, transform_indices = @transform_5, window_bounds = array<i64: 64, 1>}, {pipeline_mode = #tpu.pipeline_mode<synchronous>, transform_indices = @transform_6, window_bounds = array<i64: 1, 1>}, {transform_indices = @transform_7, window_bounds = array<i64: 1, 128>}]} {
    %c0 = arith.constant 0 : index
    %c0_0 = arith.constant 0 : index
    %0 = vector.load %arg2[%c0, %c0_0] : memref<128x32xbf16, #tpu.memory_space<vmem>>, vector<128x32xbf16>
    %c0_1 = arith.constant 0 : index
    %c0_2 = arith.constant 0 : index
    %1 = vector.load %arg1[%c0_1, %c0_2] : memref<32x128xbf16, #tpu.memory_space<vmem>>, vector<32x128xbf16>
    %cst = arith.constant dense<0.000000e+00> : vector<128x128xf32>
    %2 = tpu.matmul %0, %1, %cst {dimension_numbers = #tpu.dot_dimension_numbers<[1], [0], [0], [1], [0, 0, 1, 1], [], []>} : vector<128x32xbf16>, vector<32x128xbf16>, vector<128x128xf32> -> vector<128x128xf32>
    %c0_3 = arith.constant 0 : index
    %c0_4 = arith.constant 0 : index
    %3 = vector.load %arg3[%c0_3, %c0_4] : memref<128x1xf32, #tpu.memory_space<vmem>>, vector<128x1xf32>
    %4 = vector.broadcast %3 : vector<128x1xf32> to vector<128x128xf32>
    %5 = arith.addf %2, %4 : vector<128x128xf32>
    %cst_5 = arith.constant 0.000000e+00 : f32
    %6 = vector.broadcast %cst_5 : f32 to vector<128x128xf32>
    %7 = arith.maximumf %5, %6 : vector<128x128xf32>
    %c0_6 = arith.constant 0 : index
    %c0_7 = arith.constant 0 : index
    %8 = vector.load %arg4[%c0_6, %c0_7] : memref<64x128xbf16, #tpu.memory_space<vmem>>, vector<64x128xbf16>
    %9 = arith.truncf %7 : vector<128x128xf32> to vector<128x128xbf16>
    %cst_8 = arith.constant dense<0.000000e+00> : vector<64x128xf32>
    %10 = tpu.matmul %8, %9, %cst_8 {dimension_numbers = #tpu.dot_dimension_numbers<[1], [0], [0], [1], [0, 0, 1, 1], [], []>} : vector<64x128xbf16>, vector<128x128xbf16>, vector<64x128xf32> -> vector<64x128xf32>
    %c0_9 = arith.constant 0 : index
    %c0_10 = arith.constant 0 : index
    %11 = vector.load %arg5[%c0_9, %c0_10] : memref<64x1xf32, #tpu.memory_space<vmem>>, vector<64x1xf32>
    %12 = vector.broadcast %11 : vector<64x1xf32> to vector<64x128xf32>
    %13 = arith.addf %10, %12 : vector<64x128xf32>
    %cst_11 = arith.constant 0.000000e+00 : f32
    %14 = vector.broadcast %cst_11 : f32 to vector<64x128xf32>
    %15 = arith.maximumf %13, %14 : vector<64x128xf32>
    %c0_12 = arith.constant 0 : index
    %c0_13 = arith.constant 0 : index
    %16 = vector.load %arg6[%c0_12, %c0_13] : memref<64x1xf32, #tpu.memory_space<vmem>>, vector<64x1xf32>
    %17 = vector.broadcast %16 : vector<64x1xf32> to vector<64x128xf32>
    %18 = arith.mulf %15, %17 : vector<64x128xf32>
    %cst_14 = arith.constant dense<0.000000e+00> : vector<128xf32>
    %19 = vector.multi_reduction <add>, %18, %cst_14 [0] : vector<64x128xf32> to vector<128xf32>
    %20 = vector.shape_cast %19 : vector<128xf32> to vector<1x128xf32>
    %c0_15 = arith.constant 0 : index
    %c0_16 = arith.constant 0 : index
    %21 = vector.load %arg7[%c0_15, %c0_16] : memref<1x1xf32, #tpu.memory_space<vmem>>, vector<1x1xf32>
    %22 = vector.broadcast %21 : vector<1x1xf32> to vector<1x128xf32>
    %23 = arith.addf %20, %22 : vector<1x128xf32>
    %cst_17 = arith.constant 0.000000e+00 : f32
    %24 = vector.broadcast %cst_17 : f32 to vector<1x128xf32>
    %25 = arith.subf %24, %23 : vector<1x128xf32>
    %26 = math.exp %25 : vector<1x128xf32>
    %cst_18 = arith.constant 1.000000e+00 : f32
    %27 = vector.broadcast %cst_18 : f32 to vector<1x128xf32>
    %28 = arith.addf %27, %26 : vector<1x128xf32>
    %29 = tpu.reciprocal %28 {approx = true} : vector<1x128xf32> -> vector<1x128xf32>
    %c0_19 = arith.constant 0 : index
    %c0_20 = arith.constant 0 : index
    %30 = vector.load %arg8[%c0_19, %c0_20] : memref<1x128xf32, #tpu.memory_space<vmem>>, vector<1x128xf32>
    tpu.vector_store %arg8[%c0_19, %c0_20], %29 {strides = array<i32>} : memref<1x128xf32, #tpu.memory_space<vmem>>, vector<1x128xf32>,
    return
  }
  func.func @transform_0(%arg0: i32) -> (i32, i32) {
    %c0_i32 = arith.constant 0 : i32
    %c0_i32_0 = arith.constant 0 : i32
    return %c0_i32, %arg0 : i32, i32
  }
  func.func @transform_1(%arg0: i32) -> (i32, i32) {
    %c0_i32 = arith.constant 0 : i32
    %c0_i32_0 = arith.constant 0 : i32
    %c0_i32_1 = arith.constant 0 : i32
    return %c0_i32, %c0_i32_0 : i32, i32
  }
  func.func @transform_2(%arg0: i32) -> (i32, i32) {
    %c0_i32 = arith.constant 0 : i32
    %c0_i32_0 = arith.constant 0 : i32
    %c0_i32_1 = arith.constant 0 : i32
    return %c0_i32, %c0_i32_0 : i32, i32
  }
  func.func @transform_3(%arg0: i32) -> (i32, i32) {
    %c0_i32 = arith.constant 0 : i32
    %c0_i32_0 = arith.constant 0 : i32
    %c0_i32_1 = arith.constant 0 : i32
    return %c0_i32, %c0_i32_0 : i32, i32
  }
  func.func @transform_4(%arg0: i32) -> (i32, i32) {
    %c0_i32 = arith.constant 0 : i32
    %c0_i32_0 = arith.constant 0 : i32
    %c0_i32_1 = arith.constant 0 : i32
    return %c0_i32, %c0_i32_0 : i32, i32
  }
  func.func @transform_5(%arg0: i32) -> (i32, i32) {
    %c0_i32 = arith.constant 0 : i32
    %c0_i32_0 = arith.constant 0 : i32
    %c0_i32_1 = arith.constant 0 : i32
    return %c0_i32, %c0_i32_0 : i32, i32
  }
  func.func @transform_6(%arg0: i32) -> (i32, i32) {
    %c0_i32 = arith.constant 0 : i32
    %c0_i32_0 = arith.constant 0 : i32
    %c0_i32_1 = arith.constant 0 : i32
    return %c0_i32, %c0_i32_0 : i32, i32
  }
  func.func @transform_7(%arg0: i32) -> (i32, i32) {
    %c0_i32 = arith.constant 0 : i32
    %c0_i32_0 = arith.constant 0 : i32
    return %c0_i32, %arg0 : i32, i32
  }
}

</mosaic_0001>

<llo_original>
// kernel: tpu_custom_call.1
$region0: #{tpu_custom_call.1}
  #allocation0 [shape = 'u32[]', space=smem, size = 0x4, offset = 0x4, fixed_abs, tag = 'smem constant byte address 0x4 - core index']
  #allocation1 [shape = 'u32[144,128]{1,0:T(1,128)}', space=vmem, size = 0x12000, scoped, tag = 'internal scratch']
  #allocation2 [shape = 'f32[1,1]{1,0:T(1,128)S(1)}', space=vmem, size = 0x200, scoped, tag = 'scoped memory for tpu_custom_call.1']
  %s0 = inlined_call_operand.vmem [shape: bf16[32,128], index: 0, kind: input, shape index: {}]
  %s1 = inlined_call_operand.vmem [shape: bf16[128,32], index: 1, kind: input, shape index: {}]
  %s2 = inlined_call_operand.vmem [shape: f32[128,1], index: 2, kind: input, shape index: {}]
  %s3 = inlined_call_operand.vmem [shape: bf16[64,128], index: 3, kind: input, shape index: {}]
  %s4 = inlined_call_operand.vmem [shape: f32[64,1], index: 4, kind: input, shape index: {}]
  %s5 = inlined_call_operand.vmem [shape: f32[64,1], index: 5, kind: input, shape index: {}]
  %s6 = inlined_call_operand.<no memory space> [shape: f32[1,1], index: 6, kind: input, shape index: {}]
  %s7 = inlined_call_operand.hbm [shape: f32[1,128], index: 7, kind: output, shape index: {}]
  %s8 = sld [smem:[#allocation0]]
  $region38: #{tpu_custom_call.1} parent=0
    _
  %s10 = ssub.s32 1, %s8
  %s11 = scalar_select 0, %s10, %s8
  %v12 = vstv %s6
  %13 = vst [vmem:[#allocation2] sm:$0x1] %v12
  $region1: #{tpu_custom_call.1} parent=0
    #allocation3 [shape = 'u8[512]{0}', space=vmem, size = 0x400, scoped, tag = 'output window, operand 0, single buffered']
    #allocation4 [shape = 's32[1]{0}', space=sflag, size = 0x4, scoped, tag = 'scoped memory for tpu_custom_call.1']
    %14 = vsyncpa [#allocation4], 0
    // Predicated region
    $region2: #{tpu_custom_call.1} parent=1 // pred_check
      _
    $region3: #{tpu_custom_call.1} parent=1 // pred_check_branch
      %16 = sbr.rel (0) target = $region5
    $region4: #{tpu_custom_call.1} parent=1 // pred_region
      _
    $region5: #{tpu_custom_call.1} parent=1 // pred_fallthru
      _
    // Predicated region
    $region6: #{tpu_custom_call.1} parent=1 // pred_check
      _
    $region7: #{tpu_custom_call.1} parent=1 // pred_check_branch
      %18 = sbr.rel (0) target = $region9
    $region8: #{tpu_custom_call.1} parent=1 // pred_region
      _
    $region9: #{tpu_custom_call.1} parent=1 // pred_fallthru
      _
    // Predicated region
    $region10: #{tpu_custom_call.1} parent=1 // pred_check
      _
    $region11: #{tpu_custom_call.1} parent=1 // pred_check_branch
      %20 = sbr.rel (0) target = $region13
    $region12: #{tpu_custom_call.1} parent=1 // pred_region
      _
    $region13: #{tpu_custom_call.1} parent=1 // pred_fallthru
      _
    // Predicated region
    $region14: #{tpu_custom_call.1} parent=1 // pred_check
      _
    $region15: #{tpu_custom_call.1} parent=1 // pred_check_branch
      %22 = sbr.rel (0) target = $region17
    $region16: #{tpu_custom_call.1} parent=1 // pred_region
      _
    $region17: #{tpu_custom_call.1} parent=1 // pred_fallthru
      _
    // Predicated region
    $region18: #{tpu_custom_call.1} parent=1 // pred_check
      _
    $region19: #{tpu_custom_call.1} parent=1 // pred_check_branch
      %24 = sbr.rel (0) target = $region21
    $region20: #{tpu_custom_call.1} parent=1 // pred_region
      _
    $region21: #{tpu_custom_call.1} parent=1 // pred_fallthru
      _
    // Predicated region
    $region22: #{tpu_custom_call.1} parent=1 // pred_check
      _
    $region23: #{tpu_custom_call.1} parent=1 // pred_check_branch
      %26 = sbr.rel (0) target = $region25
    $region24: #{tpu_custom_call.1} parent=1 // pred_region
      _
    $region25: #{tpu_custom_call.1} parent=1 // pred_fallthru
      _
    // Predicated region
    $region26: #{tpu_custom_call.1} parent=1 // pred_check
      _
    $region27: #{tpu_custom_call.1} parent=1 // pred_check_branch
      %28 = sbr.rel (0) target = $region29
    $region28: #{tpu_custom_call.1} parent=1 // pred_region
      _
    $region29: #{tpu_custom_call.1} parent=1 // pred_fallthru
      _
    %v30 = vld [vmem:[%s1] sm:$0xf]
    %v31 = vld [vmem:[%s1 + $0x4] sm:$0xf]
    %v32 = vld [vmem:[%s1 + $0x8] sm:$0xf]
    %v33 = vld [vmem:[%s1 + $0xc] sm:$0xf]
    %v34 = vld [vmem:[%s1 + $0x10] sm:$0xf]
    %v35 = vld [vmem:[%s1 + $0x14] sm:$0xf]
    %v36 = vld [vmem:[%s1 + $0x18] sm:$0xf]
    %v37 = vld [vmem:[%s1 + $0x1c] sm:$0xf]
    %v38 = vld [vmem:[%s1 + $0x20] sm:$0xf]
    %v39 = vld [vmem:[%s1 + $0x24] sm:$0xf]
    %v40 = vld [vmem:[%s1 + $0x28] sm:$0xf]
    %v41 = vld [vmem:[%s1 + $0x2c] sm:$0xf]
    %v42 = vld [vmem:[%s1 + $0x30] sm:$0xf]
    %v43 = vld [vmem:[%s1 + $0x34] sm:$0xf]
    %v44 = vld [vmem:[%s1 + $0x38] sm:$0xf]
    %v45 = vld [vmem:[%s1 + $0x3c] sm:$0xf]
    %v46 = vld [vmem:[%s0] sm:$0xf]
    %v47 = vld [vmem:[%s0 + $0x4] sm:$0xf]
    %v48 = vld [vmem:[%s0 + $0x8] sm:$0xf]
    %v49 = vld [vmem:[%s0 + $0xc] sm:$0xf]
    %v50 = vld [vmem:[%s2] sm:$0xff]
    %v51 = vld [vmem:[%s2 + $0x8] sm:$0xff]
    %v52 = vld [vmem:[%s2 + $0x10] sm:$0xff]
    %v53 = vld [vmem:[%s2 + $0x18] sm:$0xff]
    %v54 = vld [vmem:[%s2 + $0x20] sm:$0xff]
    %v55 = vld [vmem:[%s2 + $0x28] sm:$0xff]
    %v56 = vld [vmem:[%s2 + $0x30] sm:$0xff]
    %v57 = vld [vmem:[%s2 + $0x38] sm:$0xff]
    %v58 = vld [vmem:[%s2 + $0x40] sm:$0xff]
    %v59 = vld [vmem:[%s2 + $0x48] sm:$0xff]
    %v60 = vld [vmem:[%s2 + $0x50] sm:$0xff]
    %v61 = vld [vmem:[%s2 + $0x58] sm:$0xff]
    %v62 = vld [vmem:[%s2 + $0x60] sm:$0xff]
    %v63 = vld [vmem:[%s2 + $0x68] sm:$0xff]
    %v64 = vld [vmem:[%s2 + $0x70] sm:$0xff]
    %v65 = vld [vmem:[%s2 + $0x78] sm:$0xff]
    %67 = vset.pattern.permute.xlu0 0
    %68 = vperm.xlu0 %67, %v50
    %v69 = vpop.permute.xlu0 %68
    %72 = vset.pattern.permute.xlu0 0
    %73 = vperm.xlu0 %72, %v51
    %v74 = vpop.permute.xlu0 %73
    %77 = vset.pattern.permute.xlu0 0
    %78 = vperm.xlu0 %77, %v52
    %v79 = vpop.permute.xlu0 %78
    %82 = vset.pattern.permute.xlu0 0
    %83 = vperm.xlu0 %82, %v53
    %v84 = vpop.permute.xlu0 %83
    %87 = vset.pattern.permute.xlu0 0
    %88 = vperm.xlu0 %87, %v54
    %v89 = vpop.permute.xlu0 %88
    %92 = vset.pattern.permute.xlu0 0
    %93 = vperm.xlu0 %92, %v55
    %v94 = vpop.permute.xlu0 %93
    %97 = vset.pattern.permute.xlu0 0
    %98 = vperm.xlu0 %97, %v56
    %v99 = vpop.permute.xlu0 %98
    %102 = vset.pattern.permute.xlu0 0
    %103 = vperm.xlu0 %102, %v57
    %v104 = vpop.permute.xlu0 %103
    %107 = vset.pattern.permute.xlu0 0
    %108 = vperm.xlu0 %107, %v58
    %v109 = vpop.permute.xlu0 %108
    %112 = vset.pattern.permute.xlu0 0
    %113 = vperm.xlu0 %112, %v59
    %v114 = vpop.permute.xlu0 %113
    %117 = vset.pattern.permute.xlu0 0
    %118 = vperm.xlu0 %117, %v60
    %v119 = vpop.permute.xlu0 %118
    %122 = vset.pattern.permute.xlu0 0
    %123 = vperm.xlu0 %122, %v61
    %v124 = vpop.permute.xlu0 %123
    %127 = vset.pattern.permute.xlu0 0
    %128 = vperm.xlu0 %127, %v62
    %v129 = vpop.permute.xlu0 %128
    %132 = vset.pattern.permute.xlu0 0
    %133 = vperm.xlu0 %132, %v63
    %v134 = vpop.permute.xlu0 %133
    %137 = vset.pattern.permute.xlu0 0
    %138 = vperm.xlu0 %137, %v64
    %v139 = vpop.permute.xlu0 %138
    %142 = vset.pattern.permute.xlu0 0
    %143 = vperm.xlu0 %142, %v65
    %v144 = vpop.permute.xlu0 %143
    %v162 = vunpack.c.l.b16 %v30
    %v163 = vunpack.c.l.b16 %v31
    %v164 = vunpack.c.l.b16 %v32
    %v165 = vunpack.c.l.b16 %v33
    %v166 = vunpack.c.l.b16 %v34
    %v167 = vunpack.c.l.b16 %v35
    %v168 = vunpack.c.l.b16 %v36
    %v169 = vunpack.c.l.b16 %v37
    %v170 = vunpack.c.l.b16 %v38
    %v171 = vunpack.c.l.b16 %v39
    %v172 = vunpack.c.l.b16 %v40
    %v173 = vunpack.c.l.b16 %v41
    %v174 = vunpack.c.l.b16 %v42
    %v175 = vunpack.c.l.b16 %v43
    %v176 = vunpack.c.l.b16 %v44
    %v177 = vunpack.c.l.b16 %v45
    %v178 = vpack.c.b16 %v163, %v162
    %v179 = vpack.c.b16 %v165, %v164
    %v180 = vpack.c.b16 %v167, %v166
    %v181 = vpack.c.b16 %v169, %v168
    %v182 = vpack.c.b16 %v171, %v170
    %v183 = vpack.c.b16 %v173, %v172
    %v184 = vpack.c.b16 %v175, %v174
    %v185 = vpack.c.b16 %v177, %v176
    %v190 = vunpack.c.l.b16 %v46
    %v191 = vunpack.c.l.b16 %v47
    %v192 = vunpack.c.l.b16 %v48
    %v193 = vunpack.c.l.b16 %v49
    %v194 = vpack.c.b16 %v191, %v190
    %v195 = vpack.c.b16 %v193, %v192
    %vm198 = vcmask 261120
    %v200 = vsel %vm198, %v178, 0
    %v203 = vsel %vm198, %v179, 0
    %v206 = vsel %vm198, %v180, 0
    %v209 = vsel %vm198, %v181, 0
    %v212 = vsel %vm198, %v182, 0
    %v215 = vsel %vm198, %v183, 0
    %v218 = vsel %vm198, %v184, 0
    %v221 = vsel %vm198, %v185, 0
    %223 = vmatprep.subr.bf16.mxu0 0
    %224 = vmatpush1.bf16.msra.mxu0 0
    %225 = vmatprep.subr.bf16.mxu0 0
    %226 = vmatpush1.bf16.msra.mxu0 0
    %227 = vmatprep.subr.bf16.mxu0 0
    %228 = vmatpush1.bf16.msra.mxu0 0
    %229 = vmatprep.subr.bf16.mxu0 0
    %230 = vmatpush1.bf16.msra.mxu0 0
    %231 = vmatprep.subr.bf16.mxu0 0
    %232 = vmatpush1.bf16.msra.mxu0 0
    %233 = vmatprep.subr.bf16.mxu0 0
    %234 = vmatpush1.bf16.msra.mxu0 0
    %235 = vmatprep.subr.bf16.mxu0 0
    %236 = vmatpush1.bf16.msra.mxu0 %v195
    %237 = vmatprep.subr.bf16.mxu0 0
    %238 = vmatpush1.bf16.msra.mxu0 %v194
    %239 = vmatprep.subr.bf16.mxu0 0
    %240 = vmatpush2.bf16.msra.mxu0 0
    %241 = vmatprep.subr.bf16.mxu0 0
    %242 = vmatpush2.bf16.msra.mxu0 0
    %243 = vmatprep.subr.bf16.mxu0 0
    %244 = vmatpush2.bf16.msra.mxu0 0
    %245 = vmatprep.subr.bf16.mxu0 0
    %246 = vmatpush2.bf16.msra.mxu0 0
    %247 = vmatprep.subr.bf16.mxu0 0
    %248 = vmatpush2.bf16.msra.mxu0 0
    %249 = vmatprep.subr.bf16.mxu0 0
    %250 = vmatpush2.bf16.msra.mxu0 0
    %251 = vmatprep.subr.bf16.mxu0 0
    %252 = vmatpush2.bf16.msra.mxu0 0
    %253 = vmatprep.subr.bf16.mxu0 0
    %254 = vmatpush2.bf16.msra.mxu0 0
    %255 = vmatprep.mubr.bf16.mxu0 0
    %256 = vmatmul.mubr.bf16.gmra.mxu0 %v200
    %v257 = vpop.f32.mrf.mxu0
    %v258 = vadd.f32 %v69, %v257
    %v259 = vpop.f32.mrf.mxu0
    %v260 = vpop.f32.mrf.mxu0
    %v261 = vadd.f32 %v74, %v260
    %v262 = vpop.f32.mrf.mxu0
    %263 = vmatprep.mubr.bf16.mxu0 0
    %264 = vmatmul.mubr.bf16.gmra.mxu0 %v203
    %v265 = vpop.f32.mrf.mxu0
    %v266 = vadd.f32 %v79, %v265
    %v267 = vpop.f32.mrf.mxu0
    %v268 = vpop.f32.mrf.mxu0
    %v269 = vadd.f32 %v84, %v268
    %v270 = vpop.f32.mrf.mxu0
    %271 = vmatprep.mubr.bf16.mxu0 0
    %272 = vmatmul.mubr.bf16.gmra.mxu0 %v206
    %v273 = vpop.f32.mrf.mxu0
    %v274 = vadd.f32 %v89, %v273
    %v275 = vpop.f32.mrf.mxu0
    %v276 = vpop.f32.mrf.mxu0
    %v277 = vadd.f32 %v94, %v276
    %v278 = vpop.f32.mrf.mxu0
    %279 = vmatprep.mubr.bf16.mxu0 0
    %280 = vmatmul.mubr.bf16.gmra.mxu0 %v209
    %v281 = vpop.f32.mrf.mxu0
    %v282 = vadd.f32 %v99, %v281
    %v283 = vpop.f32.mrf.mxu0
    %v284 = vpop.f32.mrf.mxu0
    %v285 = vadd.f32 %v104, %v284
    %v286 = vpop.f32.mrf.mxu0
    %287 = vmatprep.mubr.bf16.mxu0 0
    %288 = vmatmul.mubr.bf16.gmra.mxu0 %v212
    %v289 = vpop.f32.mrf.mxu0
    %v290 = vadd.f32 %v109, %v289
    %v291 = vpop.f32.mrf.mxu0
    %v292 = vpop.f32.mrf.mxu0
    %v293 = vadd.f32 %v114, %v292
    %v294 = vpop.f32.mrf.mxu0
    %295 = vmatprep.mubr.bf16.mxu0 0
    %296 = vmatmul.mubr.bf16.gmra.mxu0 %v215
    %v297 = vpop.f32.mrf.mxu0
    %v298 = vadd.f32 %v119, %v297
    %v299 = vpop.f32.mrf.mxu0
    %v300 = vpop.f32.mrf.mxu0
    %v301 = vadd.f32 %v124, %v300
    %v302 = vpop.f32.mrf.mxu0
    %303 = vmatprep.mubr.bf16.mxu0 0
    %304 = vmatmul.mubr.bf16.gmra.mxu0 %v218
    %v305 = vpop.f32.mrf.mxu0
    %v306 = vadd.f32 %v129, %v305
    %v307 = vpop.f32.mrf.mxu0
    %v308 = vpop.f32.mrf.mxu0
    %v309 = vadd.f32 %v134, %v308
    %v310 = vpop.f32.mrf.mxu0
    %311 = vmatprep.mubr.bf16.mxu0 0
    %312 = vmatmul.mubr.bf16.gmra.mxu0 %v221
    %v313 = vpop.f32.mrf.mxu0
    %v314 = vadd.f32 %v139, %v313
    %v315 = vpop.f32.mrf.mxu0
    %v316 = vpop.f32.mrf.mxu0
    %v317 = vadd.f32 %v144, %v316
    %v318 = vpop.f32.mrf.mxu0
    %319 = vdwg.mxu0
    %v320 = vmax.f32 %v258, 0.0
    %v321 = vmax.f32 %v261, 0.0
    %v322 = vmax.f32 %v266, 0.0
    %v323 = vmax.f32 %v269, 0.0
    %v324 = vmax.f32 %v274, 0.0
    %v325 = vmax.f32 %v277, 0.0
    %v326 = vmax.f32 %v282, 0.0
    %v327 = vmax.f32 %v285, 0.0
    %v328 = vmax.f32 %v290, 0.0
    %v329 = vmax.f32 %v293, 0.0
    %v330 = vmax.f32 %v298, 0.0
    %v331 = vmax.f32 %v301, 0.0
    %v332 = vmax.f32 %v306, 0.0
    %v333 = vmax.f32 %v309, 0.0
    %v334 = vmax.f32 %v314, 0.0
    %v335 = vmax.f32 %v317, 0.0
    %v336 = vld [vmem:[%s3] sm:$0xf]
    %v337 = vld [vmem:[%s3 + $0x4] sm:$0xf]
    %v338 = vld [vmem:[%s3 + $0x8] sm:$0xf]
    %v339 = vld [vmem:[%s3 + $0xc] sm:$0xf]
    %v340 = vld [vmem:[%s3 + $0x10] sm:$0xf]
    %v341 = vld [vmem:[%s3 + $0x14] sm:$0xf]
    %v342 = vld [vmem:[%s3 + $0x18] sm:$0xf]
    %v343 = vld [vmem:[%s3 + $0x1c] sm:$0xf]
    %v344 = vpack.c.bf16 %v321, %v320
    %v345 = vpack.c.bf16 %v323, %v322
    %v346 = vpack.c.bf16 %v325, %v324
    %v347 = vpack.c.bf16 %v327, %v326
    %v348 = vpack.c.bf16 %v329, %v328
    %v349 = vpack.c.bf16 %v331, %v330
    %v350 = vpack.c.bf16 %v333, %v332
    %v351 = vpack.c.bf16 %v335, %v334
    %v352 = vld [vmem:[%s4] sm:$0xff]
    %v353 = vld [vmem:[%s4 + $0x8] sm:$0xff]
    %v354 = vld [vmem:[%s4 + $0x10] sm:$0xff]
    %v355 = vld [vmem:[%s4 + $0x18] sm:$0xff]
    %v356 = vld [vmem:[%s4 + $0x20] sm:$0xff]
    %v357 = vld [vmem:[%s4 + $0x28] sm:$0xff]
    %v358 = vld [vmem:[%s4 + $0x30] sm:$0xff]
    %v359 = vld [vmem:[%s4 + $0x38] sm:$0xff]
    %361 = vset.pattern.permute.xlu0 0
    %362 = vperm.xlu0 %361, %v352
    %v363 = vpop.permute.xlu0 %362
    %366 = vset.pattern.permute.xlu0 0
    %367 = vperm.xlu0 %366, %v353
    %v368 = vpop.permute.xlu0 %367
    %371 = vset.pattern.permute.xlu0 0
    %372 = vperm.xlu0 %371, %v354
    %v373 = vpop.permute.xlu0 %372
    %376 = vset.pattern.permute.xlu0 0
    %377 = vperm.xlu0 %376, %v355
    %v378 = vpop.permute.xlu0 %377
    %381 = vset.pattern.permute.xlu0 0
    %382 = vperm.xlu0 %381, %v356
    %v383 = vpop.permute.xlu0 %382
    %386 = vset.pattern.permute.xlu0 0
    %387 = vperm.xlu0 %386, %v357
    %v388 = vpop.permute.xlu0 %387
    %391 = vset.pattern.permute.xlu0 0
    %392 = vperm.xlu0 %391, %v358
    %v393 = vpop.permute.xlu0 %392
    %396 = vset.pattern.permute.xlu0 0
    %397 = vperm.xlu0 %396, %v359
    %v398 = vpop.permute.xlu0 %397
    %v408 = vunpack.c.l.b16 %v336
    %v409 = vunpack.c.l.b16 %v337
    %v410 = vunpack.c.l.b16 %v338
    %v411 = vunpack.c.l.b16 %v339
    %v412 = vunpack.c.l.b16 %v340
    %v413 = vunpack.c.l.b16 %v341
    %v414 = vunpack.c.l.b16 %v342
    %v415 = vunpack.c.l.b16 %v343
    %v416 = vpack.c.b16 %v409, %v408
    %v417 = vpack.c.b16 %v411, %v410
    %v418 = vpack.c.b16 %v413, %v412
    %v419 = vpack.c.b16 %v415, %v414
    %424 = vmatprep.subr.bf16.mxu0 0
    %425 = vmatpush1.bf16.msra.mxu0 %v351
    %426 = vmatprep.subr.bf16.mxu0 0
    %427 = vmatpush1.bf16.msra.mxu0 %v350
    %428 = vmatprep.subr.bf16.mxu0 0
    %429 = vmatpush1.bf16.msra.mxu0 %v349
    %430 = vmatprep.subr.bf16.mxu0 0
    %431 = vmatpush1.bf16.msra.mxu0 %v348
    %432 = vmatprep.subr.bf16.mxu0 0
    %433 = vmatpush1.bf16.msra.mxu0 %v347
    %434 = vmatprep.subr.bf16.mxu0 0
    %435 = vmatpush1.bf16.msra.mxu0 %v346
    %436 = vmatprep.subr.bf16.mxu0 0
    %437 = vmatpush1.bf16.msra.mxu0 %v345
    %438 = vmatprep.subr.bf16.mxu0 0
    %439 = vmatpush1.bf16.msra.mxu0 %v344
    %440 = vmatprep.subr.bf16.mxu0 0
    %441 = vmatpush2.bf16.msra.mxu0 0
    %442 = vmatprep.subr.bf16.mxu0 0
    %443 = vmatpush2.bf16.msra.mxu0 0
    %444 = vmatprep.subr.bf16.mxu0 0
    %445 = vmatpush2.bf16.msra.mxu0 0
    %446 = vmatprep.subr.bf16.mxu0 0
    %447 = vmatpush2.bf16.msra.mxu0 0
    %448 = vmatprep.subr.bf16.mxu0 0
    %449 = vmatpush2.bf16.msra.mxu0 0
    %450 = vmatprep.subr.bf16.mxu0 0
    %451 = vmatpush2.bf16.msra.mxu0 0
    %452 = vmatprep.subr.bf16.mxu0 0
    %453 = vmatpush2.bf16.msra.mxu0 0
    %454 = vmatprep.subr.bf16.mxu0 0
    %455 = vmatpush2.bf16.msra.mxu0 0
    %456 = vmatprep.mubr.bf16.mxu0 0
    %457 = vmatmul.mubr.bf16.gmra.mxu0 %v416
    %v458 = vpop.f32.mrf.mxu0
    %v459 = vadd.f32 %v363, %v458
    %v460 = vpop.f32.mrf.mxu0
    %v461 = vpop.f32.mrf.mxu0
    %v462 = vadd.f32 %v368, %v461
    %v463 = vpop.f32.mrf.mxu0
    %464 = vmatprep.mubr.bf16.mxu0 0
    %465 = vmatmul.mubr.bf16.gmra.mxu0 %v417
    %v466 = vpop.f32.mrf.mxu0
    %v467 = vadd.f32 %v373, %v466
    %v468 = vpop.f32.mrf.mxu0
    %v469 = vpop.f32.mrf.mxu0
    %v470 = vadd.f32 %v378, %v469
    %v471 = vpop.f32.mrf.mxu0
    %472 = vmatprep.mubr.bf16.mxu0 0
    %473 = vmatmul.mubr.bf16.gmra.mxu0 %v418
    %v474 = vpop.f32.mrf.mxu0
    %v475 = vadd.f32 %v383, %v474
    %v476 = vpop.f32.mrf.mxu0
    %v477 = vpop.f32.mrf.mxu0
    %v478 = vadd.f32 %v388, %v477
    %v479 = vpop.f32.mrf.mxu0
    %480 = vmatprep.mubr.bf16.mxu0 0
    %481 = vmatmul.mubr.bf16.gmra.mxu0 %v419
    %v482 = vpop.f32.mrf.mxu0
    %v483 = vadd.f32 %v393, %v482
    %v484 = vpop.f32.mrf.mxu0
    %v485 = vpop.f32.mrf.mxu0
    %v486 = vadd.f32 %v398, %v485
    %v487 = vpop.f32.mrf.mxu0
    %488 = vdwg.mxu0
    %v489 = vmax.f32 %v459, 0.0
    %v490 = vmax.f32 %v462, 0.0
    %v491 = vmax.f32 %v467, 0.0
    %v492 = vmax.f32 %v470, 0.0
    %v493 = vmax.f32 %v475, 0.0
    %v494 = vmax.f32 %v478, 0.0
    %v495 = vmax.f32 %v483, 0.0
    %v496 = vmax.f32 %v486, 0.0
    %v497 = vld [vmem:[%s5] sm:$0xff]
    %v498 = vld [vmem:[%s5 + $0x8] sm:$0xff]
    %v499 = vld [vmem:[%s5 + $0x10] sm:$0xff]
    %v500 = vld [vmem:[%s5 + $0x18] sm:$0xff]
    %v501 = vld [vmem:[%s5 + $0x20] sm:$0xff]
    %v502 = vld [vmem:[%s5 + $0x28] sm:$0xff]
    %v503 = vld [vmem:[%s5 + $0x30] sm:$0xff]
    %v504 = vld [vmem:[%s5 + $0x38] sm:$0xff]
    %506 = vset.pattern.permute.xlu0 0
    %507 = vperm.xlu0 %506, %v497
    %v508 = vpop.permute.xlu0 %507
    %511 = vset.pattern.permute.xlu0 0
    %512 = vperm.xlu0 %511, %v498
    %v513 = vpop.permute.xlu0 %512
    %516 = vset.pattern.permute.xlu0 0
    %517 = vperm.xlu0 %516, %v499
    %v518 = vpop.permute.xlu0 %517
    %521 = vset.pattern.permute.xlu0 0
    %522 = vperm.xlu0 %521, %v500
    %v523 = vpop.permute.xlu0 %522
    %526 = vset.pattern.permute.xlu0 0
    %527 = vperm.xlu0 %526, %v501
    %v528 = vpop.permute.xlu0 %527
    %531 = vset.pattern.permute.xlu0 0
    %532 = vperm.xlu0 %531, %v502
    %v533 = vpop.permute.xlu0 %532
    %536 = vset.pattern.permute.xlu0 0
    %537 = vperm.xlu0 %536, %v503
    %v538 = vpop.permute.xlu0 %537
    %541 = vset.pattern.permute.xlu0 0
    %542 = vperm.xlu0 %541, %v504
    %v543 = vpop.permute.xlu0 %542
    %v545 = vmul.f32 %v489, %v508
    %v546 = vmul.f32 %v490, %v513
    %v547 = vmul.f32 %v491, %v518
    %v548 = vmul.f32 %v492, %v523
    %v549 = vmul.f32 %v493, %v528
    %v550 = vmul.f32 %v494, %v533
    %v551 = vmul.f32 %v495, %v538
    %v552 = vmul.f32 %v496, %v543
    %v553 = vadd.f32 %v545, %v546
    %v554 = vadd.f32 %v553, %v547
    %v555 = vadd.f32 %v554, %v548
    %v556 = vadd.f32 %v555, %v549
    %v557 = vadd.f32 %v556, %v550
    %v558 = vadd.f32 %v557, %v551
    %v559 = vadd.f32 %v558, %v552
    %v560 = vrot.slane %v559, 4
    %v561 = vadd.f32 %v559, %v560
    %v562 = vrot.slane %v561, 2
    %v563 = vadd.f32 %v561, %v562
    %v564 = vrot.slane %v563, 1
    %v565 = vadd.f32 %v563, %v564
    %v566 = vld [vmem:[#allocation2] sm:$0x1]
    %568 = vset.pattern.permute.xlu0 0
    %569 = vperm.xlu0 %568, %v566
    %v570 = vpop.permute.xlu0 %569
    %v572 = vlaneseq
    %v573 = vshrl.u32 %v572, 7
    %v574 = vsub.s32 0, %v573
    %v575 = vrot.slane %v570, %v574
    %v576 = vadd.f32 %v565, %v575
    %v577 = vsub.f32 0.0, %v576
    %v578 = vmul.f32 %v577, 1.442695
    %v579 = vpow.pop %v578
    %v580 = vadd.f32 %v579, 1.0
    %v581 = vrcp.pop %v580
    %582 = vst [vmem:[#allocation3] sm:$0x1] %v581
    // Predicated region
    $region30: #{tpu_custom_call.1} parent=1 // pred_check
      _
    $region31: #{tpu_custom_call.1} parent=1 // pred_check_branch
      %584 = sbr.rel (0) target = $region33
    $region32: #{tpu_custom_call.1} parent=1 // pred_region
      %s586 = ssub.s32 16, 16
      %587 = vsyncadd [#allocation4], %s586
      %s589 = sshll.u32 [#allocation3], 4
      %s590 = int_to_ptr.vmem [resolvable:$true] %s589
      %592 = dma.vmem_to_hbm [thread:$0]  %s590, 16, %s7, [#allocation4]
    $region33: #{tpu_custom_call.1} parent=1 // pred_fallthru
      _
    // Predicated region
    $region34: #{tpu_custom_call.1} parent=1 // pred_check
      _
    $region35: #{tpu_custom_call.1} parent=1 // pred_check_branch
      %594 = sbr.rel (0) target = $region37
    $region36: #{tpu_custom_call.1} parent=1 // pred_region
      %595 = dma.done [#allocation4], 16
    $region37: #{tpu_custom_call.1} parent=1 // pred_fallthru
      _
    %596 = vsyncpa [#allocation4], 1

</llo_original>
